<compile_context>
chip_gen: v5e
topology: v5e:2x2
jax: 0.10.0
libtpu: 0.0.40
codegen_flags: <defaults>
</compile_context>

<pallas_src>
import jax
import jax.numpy as jnp
import numpy as np
from jax import lax
from jax.experimental import pallas as pl
from jax.experimental.pallas import tpu as pltpu


def _make_kernel(N, C, tile_n, tiles_per_part, smoothing):
    confidence = 1.0 - smoothing
    smooth_over_c = smoothing / C

    def kernel(x_ref, t_ref, out_ref, acc_ref):
        p = pl.program_id(0)
        i = pl.program_id(1)

        @pl.when(i == 0)
        def _():
            acc_ref[...] = jnp.zeros_like(acc_ref)

        # Keep math in f32 (safe on v5e: no bf16 VPU/EUP there).
        x = x_ref[...].astype(jnp.float32)          # (tile_n, C)
        t = t_ref[...]                              # (tile_n, 1) int32

        # Numerically stable pieces of log_softmax; logprobs never built.
        m = jnp.max(x, axis=-1, keepdims=True)
        shifted = x - m
        lse = jnp.log(jnp.sum(jnp.exp(shifted), axis=-1, keepdims=True))

        # loss_row = lse - conf*shifted[target] - (smooth/C)*sum(shifted)
        #          = lse - sum((conf*onehot + smooth/C) * shifted)
        class_ids = lax.broadcasted_iota(jnp.int32, shifted.shape, 1)
        weight = jnp.where(class_ids == t,
                           jnp.float32(confidence + smooth_over_c),
                           jnp.float32(smooth_over_c))
        weighted = jnp.sum(weight * shifted, axis=-1, keepdims=True)
        loss = lse - weighted                        # (tile_n, 1)

        # Mask rows beyond N (partial last tile and any clamped duplicate
        # tile in the last partition).
        tile_idx = p * tiles_per_part + i
        row_ids = lax.broadcasted_iota(jnp.int32, (tile_n, 1), 0)
        valid = (tile_idx * tile_n + row_ids) < N
        acc_ref[...] += jnp.where(valid, loss, 0.0)

        @pl.when(i == tiles_per_part - 1)
        def _():
            partial = jnp.sum(acc_ref[...])
            # Lane-dense (8,128) block write; wrapper reads element [0,0].
            out_ref[...] = jnp.broadcast_to(partial, (1, 8, 128)).astype(jnp.float32)

    return kernel


def _choose_tile_n(N, C, itemsize, x_tile_budget_bytes=4 << 20):
    """Largest row tile with the single-buffer x tile <= ~4 MiB, multiple of 8."""
    if N <= 8:
        return N
    rows = x_tile_budget_bytes // max(1, C * itemsize)
    rows = max(8, min(rows, 1024, N))
    if rows < N:
        rows = max(8, (rows // 8) * 8)
    return N if rows >= N else rows


def label_smoothing_cross_entropy(x, target, smoothing: float = 0.1, tile_n=None):
    """x: (N, C) float logits; target: (N,) int labels. Returns scalar f32 loss."""
    N, C = x.shape
    itemsize = x.dtype.itemsize
    if tile_n is None:
        tile_n = _choose_tile_n(N, C, itemsize)
    assert tile_n == N or (tile_n % 8 == 0 and tile_n <= N), tile_n

    num_tiles = pl.cdiv(N, tile_n)
    num_parts = 2 if num_tiles >= 2 else 1          # feeds both TCs on v7x
    tiles_per_part = pl.cdiv(num_tiles, num_parts)
    last_tile = num_tiles - 1

    t2d = target.astype(jnp.int32).reshape(N, 1)

    def in_index_map(p, i):
        # Clamp so a ragged last partition never issues a fully-OOB block DMA;
        # the duplicated tile contributes nothing thanks to the row mask.
        return (jnp.minimum(p * tiles_per_part + i, last_tile), 0)

    # VMEM budget: x double buffer + lane-padded target blocks + per-row
    # accumulator + output block. Stay well under v7x's 64 MiB physical VMEM
    # while raising v5e's 16 MiB default scoped limit.
    needed = (2 * tile_n * C * itemsize
              + 2 * tile_n * 128 * 4
              + tile_n * 128 * 4
              + 2 * 8 * 128 * 4)
    vmem_limit = int(min(max(2 * needed, 32 << 20), 56 << 20))

    cost = pl.CostEstimate(
        flops=6 * N * C,
        transcendentals=N * C,
        bytes_accessed=N * C * itemsize + N * 4 + num_parts * 8 * 128 * 4,
    )

    out = pl.pallas_call(
        _make_kernel(N, C, tile_n, tiles_per_part, smoothing),
        out_shape=jax.ShapeDtypeStruct((num_parts, 8, 128), jnp.float32),
        grid_spec=pltpu.PrefetchScalarGridSpec(
            num_scalar_prefetch=0,
            grid=(num_parts, tiles_per_part),
            in_specs=[
                pl.BlockSpec((tile_n, C), in_index_map),
                pl.BlockSpec((tile_n, 1), in_index_map),
            ],
            out_specs=pl.BlockSpec((1, 8, 128), lambda p, i: (p, 0, 0)),
            scratch_shapes=[pltpu.VMEM((tile_n, 1), jnp.float32)],
        ),
        compiler_params=pltpu.CompilerParams(
            dimension_semantics=("parallel", "arbitrary"),
            vmem_limit_bytes=vmem_limit,
        ),
        cost_estimate=cost,
    )(x, t2d)

    return (jnp.sum(out[:, 0, 0]) / jnp.float32(N)).reshape(())


def _reference(x, target, smoothing=0.1):
    confidence = 1.0 - smoothing
    logprobs = jax.nn.log_softmax(x.astype(jnp.float32), axis=-1)
    nll = -jnp.take_along_axis(
        logprobs, target[:, None].astype(jnp.int32), axis=-1)[:, 0]
    smooth = -jnp.mean(logprobs, axis=-1)
    return jnp.mean(confidence * nll + smoothing * smooth)


if __name__ == "__main__":
    key = jax.random.PRNGKey(0)
    kx, kt = jax.random.split(key)
    N, C = 20, 64                     # small demo: 20 rows, 64 classes
    x = jax.random.normal(kx, (N, C), dtype=jnp.float32)
    target = jax.random.randint(kt, (N,), 0, C, dtype=jnp.int32)

    ref = jax.block_until_ready(_reference(x, target, 0.1))

    # Default tiling (single tile at this tiny N).
    loss = jax.block_until_ready(label_smoothing_cross_entropy(x, target, 0.1))
    assert np.allclose(np.asarray(loss), np.asarray(ref), rtol=1e-5, atol=1e-5), (loss, ref)

    # Forced small tile: exercises the multi-tile reduction grid, the
    # partial-last-tile row mask, and the 2-way parallel partial-sum split
    # with a ragged (clamped) last partition.
    loss_tiled = jax.block_until_ready(
        label_smoothing_cross_entropy(x, target, 0.1, tile_n=8))
    assert np.allclose(np.asarray(loss_tiled), np.asarray(ref),
                       rtol=1e-5, atol=1e-5), (loss_tiled, ref)

    print("KERNEL_OK")
</pallas_src>

<mosaic_0001>
module attributes {stable_mosaic.version = 11 : i64} {
  func.func @kernel(%arg0: i32, %arg1: i32, %arg2: memref<20x64xf32, #tpu.memory_space<vmem>>, %arg3: memref<20x1xi32, #tpu.memory_space<vmem>>, %arg4: memref<1x8x128xf32, #tpu.memory_space<vmem>>, %arg5: memref<20x1xf32, #tpu.memory_space<vmem>>) attributes {dimension_semantics = [#tpu.dimension_semantics<parallel>, #tpu.dimension_semantics<arbitrary>], iteration_bounds = array<i64: 1, 1>, scalar_prefetch = 0 : i64, scratch_operands = 1 : i64, tpu.core_type = #tpu.core_type<tc>, window_params = [{transform_indices = @transform_0, window_bounds = array<i64: 20, 64>}, {transform_indices = @transform_1, window_bounds = array<i64: 20, 1>}, {transform_indices = @transform_2, window_bounds = array<i64: 1, 8, 128>}]} {
    %c0_i32 = arith.constant 0 : i32
    %0 = arith.cmpi eq, %arg1, %c0_i32 : i32
    %1 = arith.extui %0 : i1 to i32
    %c0_i32_0 = arith.constant 0 : i32
    %2 = arith.cmpi ne, %1, %c0_i32_0 : i32
    scf.if %2 {
      %cst_16 = arith.constant 0.000000e+00 : f32
      %39 = vector.broadcast %cst_16 : f32 to vector<20x1xf32>
      %c0_17 = arith.constant 0 : index
      %c0_18 = arith.constant 0 : index
      %40 = vector.load %arg5[%c0_17, %c0_18] : memref<20x1xf32, #tpu.memory_space<vmem>>, vector<20x1xf32>
      tpu.vector_store %arg5[%c0_17, %c0_18], %39 {strides = array<i32>} : memref<20x1xf32, #tpu.memory_space<vmem>>, vector<20x1xf32>,
    } else {
    }
    %c0 = arith.constant 0 : index
    %c0_1 = arith.constant 0 : index
    %3 = vector.load %arg2[%c0, %c0_1] : memref<20x64xf32, #tpu.memory_space<vmem>>, vector<20x64xf32>
    %c0_2 = arith.constant 0 : index
    %c0_3 = arith.constant 0 : index
    %4 = vector.load %arg3[%c0_2, %c0_3] : memref<20x1xi32, #tpu.memory_space<vmem>>, vector<20x1xi32>
    %cst = arith.constant dense<0xFF800000> : vector<20xf32>
    %5 = vector.multi_reduction <maximumf>, %3, %cst [1] : vector<20x64xf32> to vector<20xf32>
    %6 = vector.shape_cast %5 : vector<20xf32> to vector<20x1xf32>
    %7 = vector.broadcast %6 : vector<20x1xf32> to vector<20x64xf32>
    %8 = arith.subf %3, %7 : vector<20x64xf32>
    %9 = math.exp %8 : vector<20x64xf32>
    %cst_4 = arith.constant dense<0.000000e+00> : vector<20xf32>
    %10 = vector.multi_reduction <add>, %9, %cst_4 [1] : vector<20x64xf32> to vector<20xf32>
    %11 = vector.shape_cast %10 : vector<20xf32> to vector<20x1xf32>
    %12 = math.log %11 : vector<20x1xf32>
    %13 = tpu.iota {dimensions = array<i32: 1>} : vector<20x64xi32>
    %14 = vector.broadcast %4 : vector<20x1xi32> to vector<20x64xi32>
    %15 = arith.cmpi eq, %13, %14 : vector<20x64xi32>
    %cst_5 = arith.constant 0.901562511 : f32
    %cst_6 = arith.constant 1.562500e-03 : f32
    %16 = vector.broadcast %cst_5 : f32 to vector<20x64xf32>
    %17 = vector.broadcast %cst_6 : f32 to vector<20x64xf32>
    %18 = arith.select %15, %16, %17 : vector<20x64xi1>, vector<20x64xf32>
    %19 = arith.mulf %18, %8 : vector<20x64xf32>
    %cst_7 = arith.constant dense<0.000000e+00> : vector<20xf32>
    %20 = vector.multi_reduction <add>, %19, %cst_7 [1] : vector<20x64xf32> to vector<20xf32>
    %21 = vector.shape_cast %20 : vector<20xf32> to vector<20x1xf32>
    %22 = arith.subf %12, %21 : vector<20x1xf32>
    %c1_i32 = arith.constant 1 : i32
    %23 = arith.muli %arg0, %c1_i32 : i32
    %24 = arith.addi %23, %arg1 : i32
    %25 = tpu.iota {dimensions = array<i32: 0>} : vector<20x1xi32>
    %c20_i32 = arith.constant 20 : i32
    %26 = arith.muli %24, %c20_i32 : i32
    %27 = vector.broadcast %26 : i32 to vector<20x1xi32>
    %28 = arith.addi %27, %25 : vector<20x1xi32>
    %c20_i32_8 = arith.constant 20 : i32
    %29 = vector.broadcast %c20_i32_8 : i32 to vector<20x1xi32>
    %30 = arith.cmpi slt, %28, %29 : vector<20x1xi32>
    %c0_9 = arith.constant 0 : index
    %c0_10 = arith.constant 0 : index
    %31 = vector.load %arg5[%c0_9, %c0_10] : memref<20x1xf32, #tpu.memory_space<vmem>>, vector<20x1xf32>
    %cst_11 = arith.constant 0.000000e+00 : f32
    %32 = vector.broadcast %cst_11 : f32 to vector<20x1xf32>
    %33 = arith.select %30, %22, %32 : vector<20x1xi1>, vector<20x1xf32>
    %34 = arith.addf %31, %33 : vector<20x1xf32>
    %c0_12 = arith.constant 0 : index
    %c0_13 = arith.constant 0 : index
    %35 = vector.load %arg5[%c0_12, %c0_13] : memref<20x1xf32, #tpu.memory_space<vmem>>, vector<20x1xf32>
    tpu.vector_store %arg5[%c0_12, %c0_13], %34 {strides = array<i32>} : memref<20x1xf32, #tpu.memory_space<vmem>>, vector<20x1xf32>,
    %c0_i32_14 = arith.constant 0 : i32
    %36 = arith.cmpi eq, %arg1, %c0_i32_14 : i32
    %37 = arith.extui %36 : i1 to i32
    %c0_i32_15 = arith.constant 0 : i32
    %38 = arith.cmpi ne, %37, %c0_i32_15 : i32
    scf.if %38 {
      %c0_16 = arith.constant 0 : index
      %c0_17 = arith.constant 0 : index
      %39 = vector.load %arg5[%c0_16, %c0_17] : memref<20x1xf32, #tpu.memory_space<vmem>>, vector<20x1xf32>
      %40 = vector.shape_cast %39 : vector<20x1xf32> to vector<1x20x1xf32>
      %cst_18 = arith.constant dense<0.000000e+00> : vector<1xf32>
      %41 = vector.multi_reduction <add>, %40, %cst_18 [1, 2] : vector<1x20x1xf32> to vector<1xf32>
      %42 = vector.shape_cast %41 : vector<1xf32> to vector<1x1x1xf32>
      %43 = vector.extract %42[0, 0, 0] : f32 from vector<1x1x1xf32>
      %44 = vector.broadcast %43 : f32 to vector<1x8x128xf32>
      %c0_19 = arith.constant 0 : index
      %c0_20 = arith.constant 0 : index
      %c0_21 = arith.constant 0 : index
      %45 = vector.load %arg4[%c0_19, %c0_20, %c0_21] : memref<1x8x128xf32, #tpu.memory_space<vmem>>, vector<1x8x128xf32>
      tpu.vector_store %arg4[%c0_19, %c0_20, %c0_21], %44 {strides = array<i32>} : memref<1x8x128xf32, #tpu.memory_space<vmem>>, vector<1x8x128xf32>,
    } else {
    }
    return
  }
  func.func @transform_0(%arg0: i32, %arg1: i32) -> (i32, i32) {
    %c1_i32 = arith.constant 1 : i32
    %0 = arith.muli %arg0, %c1_i32 : i32
    %1 = arith.addi %0, %arg1 : i32
    %c0_i32 = arith.constant 0 : i32
    %2 = arith.minsi %1, %c0_i32 : i32
    %c0_i32_0 = arith.constant 0 : i32
    %c0_i32_1 = arith.constant 0 : i32
    return %2, %c0_i32_0 : i32, i32
  }
  func.func @transform_1(%arg0: i32, %arg1: i32) -> (i32, i32) {
    %c1_i32 = arith.constant 1 : i32
    %0 = arith.muli %arg0, %c1_i32 : i32
    %1 = arith.addi %0, %arg1 : i32
    %c0_i32 = arith.constant 0 : i32
    %2 = arith.minsi %1, %c0_i32 : i32
    %c0_i32_0 = arith.constant 0 : i32
    %c0_i32_1 = arith.constant 0 : i32
    return %2, %c0_i32_0 : i32, i32
  }
  func.func @transform_2(%arg0: i32, %arg1: i32) -> (i32, i32, i32) {
    %c0_i32 = arith.constant 0 : i32
    %c0_i32_0 = arith.constant 0 : i32
    %c0_i32_1 = arith.constant 0 : i32
    return %arg0, %c0_i32, %c0_i32_0 : i32, i32, i32
  }
}

</mosaic_0001>

<llo_original>
// kernel: tpu_custom_call.1
$region0: #{tpu_custom_call.1}
  #allocation0 [shape = 'u32[]', space=smem, size = 0x4, offset = 0x4, fixed_abs, tag = 'smem constant byte address 0x4 - core index']
  #allocation1 [shape = 'u32[72,128]{1,0:T(1,128)}', space=vmem, size = 0x9000, scoped, tag = 'internal scratch']
  #allocation2 [shape = 'f32[20,1]{1,0:T(8,128)}', space=vmem, size = 0x3000, scoped, tag = 'scratch operand']
  %s0 = inlined_call_operand.vmem [shape: f32[20,64], index: 0, kind: input, shape index: {}]
  %s1 = inlined_call_operand.vmem [shape: s32[20,1], index: 1, kind: input, shape index: {}]
  %s2 = inlined_call_operand.hbm [shape: f32[1,8,128], index: 2, kind: output, shape index: {}]
  %s3 = sld [smem:[#allocation0]]
  $region26: #{tpu_custom_call.1} parent=0
    _
  %s5 = ssub.s32 1, %s3
  %s6 = scalar_select 0, %s5, %s3
  $region1: #{tpu_custom_call.1} parent=0
    #allocation3 [shape = 'u8[4096]{0}', space=vmem, size = 0x1000, scoped, tag = 'output window, operand 0, single buffered']
    #allocation4 [shape = 's32[1]{0}', space=sflag, size = 0x4, scoped, tag = 'scoped memory for tpu_custom_call.1']
    %7 = vsyncpa [#allocation4], 0
    // Predicated region
    $region2: #{tpu_custom_call.1} parent=1 // pred_check
      _
    $region3: #{tpu_custom_call.1} parent=1 // pred_check_branch
      %9 = sbr.rel (0) target = $region5
    $region4: #{tpu_custom_call.1} parent=1 // pred_region
      %s10 = sadd.s32 0, 0
      %p11 = scmp.lt.s32.totalorder %s10, 0
      %s12 = scalar_select %p11, %s10, 0
      %s13 = smul.u32 3, %s12
      %p14 = scmp.lt.s32.totalorder %s13, 2
      %s15 = scalar_select %p14, %s13, 2
      %s16 = smul.addr %s15, 8
      %s17 = scalar_lea.vmem %s0, %s16
      %s18 = sadd.s32 0, 0
      %p19 = scmp.lt.s32.totalorder %s18, 0
      %s20 = scalar_select %p19, %s18, 0
      %s21 = smul.u32 3, %s20
    $region5: #{tpu_custom_call.1} parent=1 // pred_fallthru
      _
    // Predicated region
    $region6: #{tpu_custom_call.1} parent=1 // pred_check
      _
    $region7: #{tpu_custom_call.1} parent=1 // pred_check_branch
      %23 = sbr.rel (0) target = $region9
    $region8: #{tpu_custom_call.1} parent=1 // pred_region
      %s24 = sadd.s32 0, 0
      %p25 = scmp.lt.s32.totalorder %s24, 0
      %s26 = scalar_select %p25, %s24, 0
      %s27 = smul.u32 3, %s26
      %p28 = scmp.lt.s32.totalorder %s27, 2
      %s29 = scalar_select %p28, %s27, 2
      %s30 = smul.addr %s29, 8
      %s31 = scalar_lea.vmem %s1, %s30
      %s32 = sadd.s32 0, 0
      %p33 = scmp.lt.s32.totalorder %s32, 0
      %s34 = scalar_select %p33, %s32, 0
      %s35 = smul.u32 3, %s34
    $region9: #{tpu_custom_call.1} parent=1 // pred_fallthru
      _
    %s36 = sadd.s32 0, 0
    %p37 = scmp.lt.s32.totalorder %s36, 0
    %s38 = scalar_select %p37, %s36, 0
    %s39 = smul.u32 3, %s38
    %p40 = scmp.lt.s32.totalorder %s39, 2
    %s41 = scalar_select %p40, %s39, 2
    %s42 = smul.addr %s41, 8
    %s43 = scalar_lea.vmem %s0, %s42
    %s44 = sadd.s32 0, 0
    %p45 = scmp.lt.s32.totalorder %s44, 0
    %s46 = scalar_select %p45, %s44, 0
    %s47 = smul.u32 3, %s46
    %p48 = scmp.lt.s32.totalorder %s47, 2
    %s49 = scalar_select %p48, %s47, 2
    %s50 = smul.addr %s49, 8
    %s51 = scalar_lea.vmem %s1, %s50
    %s52 = sadd.s32 0, 0
    %p53 = scmp.lt.s32.totalorder %s52, 0
    %s54 = scalar_select %p53, %s52, 0
    %s55 = smul.u32 3, %s54
    %p56 = scmp.lt.s32.totalorder %s55, 2
    %s57 = scalar_select %p56, %s55, 2
    %s58 = smul.addr %s57, 8
    %s59 = scalar_lea.vmem %s0, %s58
    %s60 = sadd.s32 0, 0
    %p61 = scmp.lt.s32.totalorder %s60, 0
    %s62 = scalar_select %p61, %s60, 0
    %s63 = smul.u32 3, %s62
    %s64 = sadd.s32 0, 0
    %p65 = scmp.lt.s32.totalorder %s64, 0
    %s66 = scalar_select %p65, %s64, 0
    %s67 = smul.u32 3, %s66
    %p68 = scmp.lt.s32.totalorder %s67, 2
    %s69 = scalar_select %p68, %s67, 2
    %s70 = smul.addr %s69, 8
    %s71 = scalar_lea.vmem %s1, %s70
    %s72 = sadd.s32 0, 0
    %p73 = scmp.lt.s32.totalorder %s72, 0
    %s74 = scalar_select %p73, %s72, 0
    %s75 = smul.u32 3, %s74
    %p76 = scmp.eq.s32.totalorder 0, 0
    // Predicated region
    $region10: #{tpu_custom_call.1} parent=1 // pred_check
      %p77 = pneg %p76
    $region11: #{tpu_custom_call.1} parent=1 // pred_check_branch
      %79 = sbr.rel (%p77) target = $region13
    $region12: #{tpu_custom_call.1} parent=1 // pred_region
      %vm80 = vcmask 7168
      %81 = vst.msk [vmem:[#allocation2] sm:$0xff] %vm80, 0.0
      %82 = vst.msk [vmem:[#allocation2 + $0x8] sm:$0xff] %vm80, 0.0
      %vm83 = vcmask 3072
      %84 = vst.msk [vmem:[#allocation2 + $0x10] sm:$0xf] %vm83, 0.0
    $region13: #{tpu_custom_call.1} parent=1 // pred_fallthru
      _
    %v85 = vld [vmem:[%s59] sm:$0xff]
    %v86 = vld [vmem:[%s59 + $0x8] sm:$0xff]
    %v87 = vld [vmem:[%s59 + $0x10] sm:$0xf]
    %v88 = vld [vmem:[%s71] sm:$0xff]
    %v89 = vld [vmem:[%s71 + $0x8] sm:$0xff]
    %v90 = vld [vmem:[%s71 + $0x10] sm:$0xf]
    %vm91 = vcmask 523264
    %v92 = vsel %vm91, %v85, -inf
    %93 = vmax.xlane.f32.xlu0 %v92
    %v94 = vpop.xlane.xlu0 %93
    %v95 = vsel %vm91, %v86, -inf
    %96 = vmax.xlane.f32.xlu0 %v95
    %v97 = vpop.xlane.xlu0 %96
    %vm98 = vcmask 519168
    %v99 = vsel %vm98, %v87, -inf
    %100 = vmax.xlane.f32.xlu0 %v99
    %v101 = vpop.xlane.xlu0 %100
    %v102 = vsub.f32 %v85, %v94
    %v103 = vsub.f32 %v86, %v97
    %v104 = vsub.f32 %v87, %v101
    %v105 = vmul.f32 %v102, 1.442695
    %v106 = vpow.pop %v105
    %v107 = vmul.f32 %v103, 1.442695
    %v108 = vpow.pop %v107
    %v109 = vmul.f32 %v104, 1.442695
    %v110 = vpow.pop %v109
    %v111 = vsel %vm91, %v106, 0.0
    %112 = vadd.xlane.f32.xlu0 %v111
    %v113 = vpop.xlane.xlu0 %112
    %v114 = vsel %vm91, %v108, 0.0
    %115 = vadd.xlane.f32.xlu0 %v114
    %v116 = vpop.xlane.xlu0 %115
    %v117 = vsel %vm98, %v110, 0.0
    %118 = vadd.xlane.f32.xlu0 %v117
    %v119 = vpop.xlane.xlu0 %118
    %v120 = vlog2.pop %v113
    %v121 = vmul.f32 %v120, 0.6931472
    %v122 = vlog2.pop %v116
    %v123 = vmul.f32 %v122, 0.6931472
    %v124 = vlog2.pop %v119
    %v125 = vmul.f32 %v124, 0.6931472
    %v126 = vlaneseq
    %v127 = vand.u32 %v126, 127
    %128 = vset.pattern.permute.xlu0 0
    %129 = vperm.xlu0 %128, %v88
    %v130 = vpop.permute.xlu0 %129
    %131 = vset.pattern.permute.xlu0 0
    %132 = vperm.xlu0 %131, %v89
    %v133 = vpop.permute.xlu0 %132
    %134 = vset.pattern.permute.xlu0 0
    %135 = vperm.xlu0 %134, %v90
    %v136 = vpop.permute.xlu0 %135
    %vm137 = vcmp.eq.s32.totalorder %v127, %v130
    %vm138 = vcmp.eq.s32.totalorder %v127, %v133
    %vm139 = vcmp.eq.s32.totalorder %v127, %v136
    %v140 = vsel %vm137, 0.9015625, 0.0015625
    %v141 = vsel %vm138, 0.9015625, 0.0015625
    %v142 = vsel %vm139, 0.9015625, 0.0015625
    %v143 = vmul.f32 %v140, %v102
    %v144 = vmul.f32 %v141, %v103
    %v145 = vmul.f32 %v142, %v104
    %v146 = vsel %vm91, %v143, 0.0
    %147 = vadd.xlane.f32.xlu0 %v146
    %v148 = vpop.xlane.xlu0 %147
    %v149 = vsel %vm91, %v144, 0.0
    %150 = vadd.xlane.f32.xlu0 %v149
    %v151 = vpop.xlane.xlu0 %150
    %v152 = vsel %vm98, %v145, 0.0
    %153 = vadd.xlane.f32.xlu0 %v152
    %v154 = vpop.xlane.xlu0 %153
    %v155 = vsub.f32 %v121, %v148
    %v156 = vsub.f32 %v123, %v151
    %v157 = vsub.f32 %v125, %v154
    %s158 = sadd.s32 0, 0
    %v159 = vlaneseq
    %v160 = vshrl.u32 %v159, 7
    %v161 = vadd.s32 %v160, 8
    %v162 = vadd.s32 %v160, 16
    %s163 = smul.u32 %s158, 20
    %v164 = vstv %s163
    %v165 = vadd.s32 %v164, %v160
    %v166 = vadd.s32 %v164, %v161
    %v167 = vadd.s32 %v164, %v162
    %vm168 = vcmp.lt.s32.totalorder %v165, 20
    %vm169 = vcmp.lt.s32.totalorder %v166, 20
    %vm170 = vcmp.lt.s32.totalorder %v167, 20
    %v171 = vld [vmem:[#allocation2] sm:$0xff]
    %v172 = vld [vmem:[#allocation2 + $0x8] sm:$0xff]
    %v173 = vld [vmem:[#allocation2 + $0x10] sm:$0xf]
    %v174 = vsel %vm168, %v155, 0.0
    %v175 = vsel %vm169, %v156, 0.0
    %v176 = vsel %vm170, %v157, 0.0
    %v177 = vadd.f32 %v171, %v174
    %v178 = vadd.f32 %v172, %v175
    %v179 = vadd.f32 %v173, %v176
    %vm180 = vcmask 7168
    %181 = vst.msk [vmem:[#allocation2] sm:$0xff] %vm180, %v177
    %182 = vst.msk [vmem:[#allocation2 + $0x8] sm:$0xff] %vm180, %v178
    %vm183 = vcmask 3072
    %184 = vst.msk [vmem:[#allocation2 + $0x10] sm:$0xf] %vm183, %v179
    // Predicated region
    $region14: #{tpu_custom_call.1} parent=1 // pred_check
      %p185 = pneg %p76
    $region15: #{tpu_custom_call.1} parent=1 // pred_check_branch
      %187 = sbr.rel (%p185) target = $region17
    $region16: #{tpu_custom_call.1} parent=1 // pred_region
      %v188 = vld [vmem:[#allocation2] sm:$0xff]
      %v189 = vld [vmem:[#allocation2 + $0x8] sm:$0xff]
      %v190 = vld [vmem:[#allocation2 + $0x10] sm:$0xf]
      %v191 = vsel %vm180, %v188, 0.0
      %v192 = vsel %vm180, %v189, 0.0
      %v193 = vadd.f32 %v191, %v192
      %v194 = vsel %vm183, %v190, 0.0
      %v195 = vadd.f32 %v193, %v194
      %196 = vadd.xlane.f32.xlu0 %v195
      %v197 = vpop.xlane.xlu0 %196
      %v198 = vrot.slane %v197, 4
      %v199 = vadd.f32 %v197, %v198
      %v200 = vrot.slane %v199, 2
      %v201 = vadd.f32 %v199, %v200
      %v202 = vrot.slane %v201, 1
      %v203 = vadd.f32 %v201, %v202
      %s204 = vtos %v203
      %v205 = vstv %s204
      %206 = vst [vmem:[#allocation3] sm:$0xff] %v205
    $region17: #{tpu_custom_call.1} parent=1 // pred_fallthru
      _
    // Predicated region
    $region18: #{tpu_custom_call.1} parent=1 // pred_check
      _
    $region19: #{tpu_custom_call.1} parent=1 // pred_check_branch
      %208 = sbr.rel (0) target = $region21
    $region20: #{tpu_custom_call.1} parent=1 // pred_region
      %210 = vsyncadd [#allocation4], 0
      %s212 = sshll.u32 [#allocation3], 4
      %s213 = int_to_ptr.vmem [resolvable:$true] %s212
      %s214 = sshll.u32 %s2, 4
      %s215 = int_to_ptr.hbm [resolvable:$true] %s214
      %217 = dma.vmem_to_hbm [thread:$0]  %s213, 128, %s215, [#allocation4]
    $region21: #{tpu_custom_call.1} parent=1 // pred_fallthru
      _
    // Predicated region
    $region22: #{tpu_custom_call.1} parent=1 // pred_check
      _
    $region23: #{tpu_custom_call.1} parent=1 // pred_check_branch
      %219 = sbr.rel (0) target = $region25
    $region24: #{tpu_custom_call.1} parent=1 // pred_region
      %221 = dma.done [#allocation4], 128
    $region25: #{tpu_custom_call.1} parent=1 // pred_fallthru
      _
    %222 = vsyncpa [#allocation4], 1

</llo_original>
